<compile_context>
chip_gen: v7x
topology: tpu7x:2x2x1
jax: 0.10.0
libtpu: 0.0.40
codegen_flags: <defaults>
</compile_context>

<pallas_src>
import jax
import jax.numpy as jnp
from jax.experimental import pallas as pl
from jax.experimental.pallas import tpu as pltpu


def _round_up(v, m):
    return ((v + m - 1) // m) * m


def _pad_channels(c):
    return max(128, _round_up(c, 128))


def _vmem_limit_bytes():
    cap = 64 * 1024 * 1024
    try:
        info = pltpu.get_tpu_info()
        c = getattr(info, "vmem_capacity_bytes", None)
        if c:
            cap = int(c)
    except Exception:
        pass
    return min(int(cap * 3 // 4), 112 * 1024 * 1024)


_CPARAMS = pltpu.CompilerParams(
    dimension_semantics=("parallel",),
    vmem_limit_bytes=_vmem_limit_bytes(),
)


def _relu6(x):
    return jnp.minimum(jnp.maximum(x, 0.0), 6.0)


def _full_spec(arr):
    """Whole-array block re-used at every grid step (weights / masks)."""
    zeros = (0,) * arr.ndim
    return pl.BlockSpec(arr.shape, lambda n, _z=zeros: _z)


# ----------------------------------------------------------------------------
# Kernels
# ----------------------------------------------------------------------------
def _conv1_kernel(x_ref, msk_ref, w_ref, s_ref, b_ref, o_ref):
    """im2col 3x3/s2 conv + folded BN + ReLU6; output in padded-row, lane-dense layout."""
    acc = jnp.dot(x_ref[0], w_ref[...], preferred_element_type=jnp.float32)
    y = _relu6(acc * s_ref[...] + b_ref[...]) * msk_ref[...]
    o_ref[0] = y.astype(o_ref.dtype)


def _make_bottleneck_kernel(*, t, stride, residual, Wo, Rout, F, hid_p):
    """Fused expand(1x1)+BN+ReLU6 -> depthwise(3x3)+BN+ReLU6 -> project(1x1)+BN [+residual]."""
    n_phase = 1 if stride == 1 else 4
    Wp1 = Wo + 1                      # row stride of the padded layout (output resolution)

    def kernel(*refs):
        it = iter(refs)
        x_ref = next(it)
        msk_ref = next(it)
        if t != 1:
            we_ref = next(it)
            se_ref = next(it)
            be_ref = next(it)
        wd_ref = next(it)
        sd_ref = next(it)
        bd_ref = next(it)
        wp_ref = next(it)
        sp_ref = next(it)
        bp_ref = next(it)
        o_ref = next(it)
        hid_ref = next(it)

        msk = msk_ref[...]                                        # (Rout, 1) f32 valid-pixel mask
        zpad = jnp.zeros((F, hid_p), dtype=hid_ref.dtype)

        # ---- 1) expansion 1x1 + BN + ReLU6, written to a bf16 VMEM scratch ----
        if t != 1:
            we = we_ref[...]
            se = jnp.broadcast_to(se_ref[...], (Rout, hid_p))     # hoisted out of phase loop
            be = jnp.broadcast_to(be_ref[...], (Rout, hid_p))
            for p in range(n_phase):
                hid_ref[p, 0:F, :] = zpad                         # front pad rows
                h = jnp.dot(x_ref[p], we, preferred_element_type=jnp.float32)
                h = _relu6(h * se + be) * msk                     # mask kills pad columns
                hid_ref[p, F:F + Rout, :] = h.astype(hid_ref.dtype)
                if stride == 1:
                    hid_ref[p, F + Rout:F + Rout + F, :] = zpad   # back pad rows
        else:
            # no expansion: depthwise runs directly on the (already pad-column-zeroed) input
            for p in range(n_phase):
                hid_ref[p, 0:F, :] = zpad
                hid_ref[p, F:F + Rout, :] = x_ref[p]
                if stride == 1:
                    hid_ref[p, F + Rout:F + Rout + F, :] = zpad

        # ---- 2) depthwise 3x3 + BN + ReLU6 (taps = constant row shifts, no masks) ----
        acc = jnp.zeros((Rout, hid_p), jnp.float32)
        for ky in range(3):
            for kx in range(3):
                k = 3 * ky + kx
                if stride == 1:
                    p = 0
                    off = F + (ky - 1) * Wp1 + (kx - 1)
                else:
                    p = 2 * ((ky + 1) % 2) + ((kx + 1) % 2)       # phase (row parity, col parity)
                    off = F + (-Wp1 if ky == 0 else 0) + (-1 if kx == 0 else 0)
                tap = hid_ref[p, off:off + Rout, :].astype(jnp.float32)
                acc = acc + tap * wd_ref[k]
        y = _relu6(acc * sd_ref[...] + bd_ref[...])

        # ---- 3) projection 1x1 + BN (+ residual); re-zero the pad-column rows ----
        y = jnp.dot(y.astype(jnp.bfloat16), wp_ref[...], preferred_element_type=jnp.float32)
        y = y * sp_ref[...] + bp_ref[...]
        if residual:
            y = y + x_ref[0].astype(jnp.float32)
        o_ref[0] = (y * msk).astype(o_ref.dtype)

    return kernel


def _make_tail_kernel(*, inv_r):
    """feature 1x1 conv + BN + ReLU6 -> masked global avg pool (pooled feature only)."""
    def kernel(x_ref, msk_ref, wf_ref, sf_ref, bf_ref, o_ref):
        f = jnp.dot(x_ref[0], wf_ref[...], preferred_element_type=jnp.float32)
        f = _relu6(f * sf_ref[...] + bf_ref[...]) * msk_ref[...]
        o_ref[0] = (jnp.sum(f, axis=0, keepdims=True) * inv_r).astype(o_ref.dtype)
    return kernel


def _classifier_kernel(x_ref, w_ref, b_ref, o_ref):
    logits = jnp.dot(x_ref[...].astype(jnp.bfloat16), w_ref[...],
                     preferred_element_type=jnp.float32) + b_ref[...]
    o_ref[...] = logits


# ----------------------------------------------------------------------------
# pallas_call wrappers
# ----------------------------------------------------------------------------
def _conv1_block(x_nhwc, p):
    N, H, W, Cin = x_nhwc.shape
    assert H % 2 == 0 and W % 2 == 0
    H2, W2 = H // 2, W // 2
    W2p = W2 + 1
    Rout = H2 * W2p
    C1p = p["w"].shape[-1]

    # im2col (single K=9*Cin matmul in the kernel); output laid out with one zero pad column.
    xp = jnp.pad(x_nhwc, ((0, 0), (1, 1), (1, 1), (0, 0)))
    taps = [xp[:, dy:dy + H:2, dx:dx + W:2, :] for dy in range(3) for dx in range(3)]
    patches = jnp.concatenate(taps, axis=-1)                           # (N, H2, W2, 9*Cin)
    patches = jnp.pad(patches, ((0, 0), (0, 0), (0, 1), (0, 0)))       # zero pad column
    patches = patches.reshape(N, Rout, 9 * Cin).astype(jnp.bfloat16)

    col = jnp.arange(Rout, dtype=jnp.int32) % W2p
    msk = (col < W2).astype(jnp.float32).reshape(Rout, 1)

    inputs = [patches, msk, p["w"], p["s"], p["b"]]
    in_specs = [pl.BlockSpec((1, Rout, 9 * Cin), lambda n: (n, 0, 0))]
    in_specs += [_full_spec(a) for a in inputs[1:]]

    out = pl.pallas_call(
        _conv1_kernel,
        grid=(N,),
        out_shape=jax.ShapeDtypeStruct((N, Rout, C1p), jnp.bfloat16),
        in_specs=in_specs,
        out_specs=pl.BlockSpec((1, Rout, C1p), lambda n: (n, 0, 0)),
        compiler_params=_CPARAMS,
    )(*inputs)
    return out, H2, W2


def _bottleneck_block(x_flat, H, W, lp):
    N = x_flat.shape[0]
    Cin_p = x_flat.shape[-1]
    t, stride = lp["t"], lp["stride"]
    in_c, out_c = lp["in_c"], lp["out_c"]
    hid_p = lp["w_dw"].shape[-1]
    Cout_p = lp["w_pw"].shape[-1]
    residual = (stride == 1 and in_c == out_c)

    if stride == 1:
        Ho, Wo = H, W
        Wop1 = Wo + 1
        Rout = Ho * Wop1
        assert x_flat.shape[1] == Rout
        xin = x_flat                                  # already in padded-row layout, no copies
        in_block = (1, Rout, Cin_p)
        n_phase = 1
        F = _round_up(Wo + 2, 8)
        Rp = F + Rout + F
    else:
        assert H % 2 == 0 and W % 2 == 0
        Ho, Wo = H // 2, W // 2
        Wop1 = Wo + 1
        Rout = Ho * Wop1
        # phase-decompose the padded-row input (only stride-2 blocks touch HBM in the wrapper)
        xs = x_flat.reshape(N, H, W + 1, Cin_p)[:, :, :W, :]
        phases = jnp.stack([xs[:, pr::2, pc::2, :] for pr in (0, 1) for pc in (0, 1)], axis=1)
        phases = jnp.pad(phases, ((0, 0), (0, 0), (0, 0), (0, 1), (0, 0)))   # zero pad column
        xin = phases.reshape(N * 4, Rout, Cin_p)
        in_block = (4, Rout, Cin_p)
        n_phase = 4
        F = _round_up(Wop1 + 1, 8)
        Rp = F + Rout

    col = jnp.arange(Rout, dtype=jnp.int32) % Wop1
    msk = (col < Wo).astype(jnp.float32).reshape(Rout, 1)

    inputs = [xin, msk]
    if t != 1:
        inputs += [lp["w_exp"], lp["s_exp"], lp["b_exp"]]
    inputs += [lp["w_dw"], lp["s_dw"], lp["b_dw"], lp["w_pw"], lp["s_pw"], lp["b_pw"]]

    in_specs = [pl.BlockSpec(in_block, lambda n: (n, 0, 0))]
    in_specs += [_full_spec(a) for a in inputs[1:]]

    kernel = _make_bottleneck_kernel(t=t, stride=stride, residual=residual,
                                     Wo=Wo, Rout=Rout, F=F, hid_p=hid_p)
    out = pl.pallas_call(
        kernel,
        grid=(N,),
        out_shape=jax.ShapeDtypeStruct((N, Rout, Cout_p), jnp.bfloat16),
        in_specs=in_specs,
        out_specs=pl.BlockSpec((1, Rout, Cout_p), lambda n: (n, 0, 0)),
        scratch_shapes=[pltpu.VMEM((n_phase, Rp, hid_p), jnp.bfloat16)],
        compiler_params=_CPARAMS,
    )(*inputs)
    return out, Ho, Wo


def _tail_pool_block(x_flat, H, W, p_feat):
    N, Rin, Cin_p = x_flat.shape
    Wp1 = W + 1
    assert Rin == H * Wp1
    Cf_p = p_feat["w"].shape[-1]

    col = jnp.arange(Rin, dtype=jnp.int32) % Wp1
    msk = (col < W).astype(jnp.float32).reshape(Rin, 1)
    inv_r = 1.0 / float(H * W)

    inputs = [x_flat, msk, p_feat["w"], p_feat["s"], p_feat["b"]]
    in_specs = [pl.BlockSpec((1, Rin, Cin_p), lambda n: (n, 0, 0))]
    in_specs += [_full_spec(a) for a in inputs[1:]]

    pooled = pl.pallas_call(
        _make_tail_kernel(inv_r=inv_r),
        grid=(N,),
        out_shape=jax.ShapeDtypeStruct((N, 1, Cf_p), jnp.float32),
        in_specs=in_specs,
        out_specs=pl.BlockSpec((1, 1, Cf_p), lambda n: (n, 0, 0)),
        compiler_params=_CPARAMS,
    )(*inputs)
    return pooled.reshape(N, Cf_p)


def _classifier_block(pooled, p_out):
    N, _ = pooled.shape
    ncls_p = p_out["w"].shape[-1]
    inputs = [pooled, p_out["w"], p_out["b"]]
    out = pl.pallas_call(
        _classifier_kernel,
        grid=(1,),
        out_shape=jax.ShapeDtypeStruct((N, ncls_p), jnp.float32),
        in_specs=[_full_spec(a) for a in inputs],
        out_specs=pl.BlockSpec((N, ncls_p), lambda n: (0, 0)),
        compiler_params=_CPARAMS,
    )(*inputs)
    return out


# ----------------------------------------------------------------------------
# Forward pass
# ----------------------------------------------------------------------------
def mobilenet_v2_forward(x_nchw, params):
    x = jnp.transpose(x_nchw, (0, 2, 3, 1)).astype(jnp.bfloat16)   # NCHW -> NHWC, bf16
    x, H, W = _conv1_block(x, params["conv1"])
    for lp in params["layers"]:
        x, H, W = _bottleneck_block(x, H, W, lp)
    pooled = _tail_pool_block(x, H, W, params["feature"])
    logits = _classifier_block(pooled, params["out"])
    N = logits.shape[0]
    n_cls = params["num_classes"]
    return logits[:, :n_cls].reshape(N, n_cls, 1, 1)               # matches PyTorch output


# ----------------------------------------------------------------------------
# Deterministic synthetic parameters (BN folded; channel dims zero-padded to 128 multiples)
# ----------------------------------------------------------------------------
def _bn_fold(key, c, cp):
    k1, k2, k3, k4 = jax.random.split(key, 4)
    gamma = jax.random.uniform(k1, (c,), jnp.float32, 0.5, 1.5)
    beta = 0.1 * jax.random.normal(k2, (c,), jnp.float32)
    mean = 0.1 * jax.random.normal(k3, (c,), jnp.float32)
    var = jax.random.uniform(k4, (c,), jnp.float32, 0.5, 1.5)
    scale = gamma / jnp.sqrt(var + 1e-5)
    bias = beta - mean * scale
    return (jnp.pad(scale, (0, cp - c)).reshape(1, cp),
            jnp.pad(bias, (0, cp - c)).reshape(1, cp))


def build_params(details, in_fts, num_classes, wm):
    base = jax.random.PRNGKey(0)
    cnt = [0]

    def nk():
        cnt[0] += 1
        return jax.random.fold_in(base, cnt[0])

    def w_init(r, c, rp, cp, dtype=jnp.bfloat16):
        w = 0.1 * jax.random.normal(nk(), (r, c), jnp.float32)
        return jnp.pad(w, ((0, rp - r), (0, cp - c))).astype(dtype)

    params = {"num_classes": num_classes}

    c1 = round(wm * 32)
    c1p = _pad_channels(c1)
    s1, b1 = _bn_fold(nk(), c1, c1p)
    params["conv1"] = dict(w=w_init(9 * in_fts, c1, 9 * in_fts, c1p), s=s1, b=b1)

    # Replicate MobileNet_v2.constructLayer sequencing.
    layer_cfg = []
    in_c = c1
    for (t, out_fts, n, stride) in details:
        out_c = round(wm * out_fts)
        if stride == 1:
            for _ in range(n):
                layer_cfg.append((in_c, out_c, t, 1))
                in_c = out_c
        elif stride == 2:
            layer_cfg.append((in_c, out_c, t, 2))
            in_c = out_c
            for _ in range(1, n):
                layer_cfg.append((in_c, out_c, t, 1))

    layers = []
    for (lc_in, lc_out, t, stride) in layer_cfg:
        hidden = t * lc_in
        cin_p, cout_p, hid_p = _pad_channels(lc_in), _pad_channels(lc_out), _pad_channels(hidden)
        lp = dict(in_c=lc_in, out_c=lc_out, t=t, stride=stride)
        if t != 1:
            lp["w_exp"] = w_init(lc_in, hidden, cin_p, hid_p)
            lp["s_exp"], lp["b_exp"] = _bn_fold(nk(), hidden, hid_p)
        wd = 0.1 * jax.random.normal(nk(), (9, hidden), jnp.float32)
        lp["w_dw"] = jnp.pad(wd, ((0, 0), (0, hid_p - hidden)))
        lp["s_dw"], lp["b_dw"] = _bn_fold(nk(), hidden, hid_p)
        lp["w_pw"] = w_init(hidden, lc_out, hid_p, cout_p)
        lp["s_pw"], lp["b_pw"] = _bn_fold(nk(), lc_out, cout_p)
        layers.append(lp)
    params["layers"] = layers

    cf = round(wm * 1280)
    cfp = _pad_channels(cf)
    in_cp = _pad_channels(in_c)
    sf, bf = _bn_fold(nk(), cf, cfp)
    params["feature"] = dict(w=w_init(in_c, cf, in_cp, cfp), s=sf, b=bf)

    nclsp = _pad_channels(num_classes)
    b_out = 0.1 * jax.random.normal(nk(), (num_classes,), jnp.float32)
    params["out"] = dict(
        w=w_init(cf, num_classes, cfp, nclsp),
        b=jnp.pad(b_out, (0, nclsp - num_classes)).reshape(1, nclsp),
    )
    return params


# ----------------------------------------------------------------------------
if __name__ == "__main__":
    # Small synthetic config consistent with the module's constructor signature.
    bottleNeckLayerDetails = [
        (1, 16, 1, 1),   # (expansion t, out_fts, n, stride)
        (6, 24, 2, 2),
        (6, 32, 2, 2),
    ]
    width_multiplier = 0.25
    num_classes = 10
    in_fts = 3

    params = build_params(bottleNeckLayerDetails, in_fts, num_classes, width_multiplier)

    x = jax.random.normal(jax.random.PRNGKey(0), (2, in_fts, 32, 32), jnp.float32)

    out = mobilenet_v2_forward(x, params)
    out = jax.block_until_ready(out)

    assert out.shape == (2, num_classes, 1, 1), out.shape
    assert bool(jnp.all(jnp.isfinite(out)))
    print("KERNEL_OK")
</pallas_src>

<mosaic_0001>
module attributes {stable_mosaic.version = 11 : i64} {
  func.func @_conv1_kernel(%arg0: i32, %arg1: memref<1x272x27xbf16, #tpu.memory_space<vmem>>, %arg2: memref<272x1xf32, #tpu.memory_space<vmem>>, %arg3: memref<27x128xbf16, #tpu.memory_space<vmem>>, %arg4: memref<1x128xf32, #tpu.memory_space<vmem>>, %arg5: memref<1x128xf32, #tpu.memory_space<vmem>>, %arg6: memref<1x272x128xbf16, #tpu.memory_space<vmem>>) attributes {dimension_semantics = [#tpu.dimension_semantics<parallel>], iteration_bounds = array<i64: 2>, scalar_prefetch = 0 : i64, scratch_operands = 0 : i64, tpu.core_type = #tpu.core_type<tc>, window_params = [{transform_indices = @transform_0, window_bounds = array<i64: 1, 272, 27>}, {pipeline_mode = #tpu.pipeline_mode<synchronous>, transform_indices = @transform_1, window_bounds = array<i64: 272, 1>}, {pipeline_mode = #tpu.pipeline_mode<synchronous>, transform_indices = @transform_2, window_bounds = array<i64: 27, 128>}, {pipeline_mode = #tpu.pipeline_mode<synchronous>, transform_indices = @transform_3, window_bounds = array<i64: 1, 128>}, {pipeline_mode = #tpu.pipeline_mode<synchronous>, transform_indices = @transform_4, window_bounds = array<i64: 1, 128>}, {transform_indices = @transform_5, window_bounds = array<i64: 1, 272, 128>}]} {
    %c0 = arith.constant 0 : index
    %c0_0 = arith.constant 0 : index
    %c0_1 = arith.constant 0 : index
    %0 = vector.load %arg1[%c0, %c0_0, %c0_1] : memref<1x272x27xbf16, #tpu.memory_space<vmem>>, vector<1x272x27xbf16>
    %1 = vector.shape_cast %0 : vector<1x272x27xbf16> to vector<272x27xbf16>
    %c0_2 = arith.constant 0 : index
    %c0_3 = arith.constant 0 : index
    %2 = vector.load %arg3[%c0_2, %c0_3] : memref<27x128xbf16, #tpu.memory_space<vmem>>, vector<27x128xbf16>
    %cst = arith.constant dense<0.000000e+00> : vector<272x128xf32>
    %3 = tpu.matmul %1, %2, %cst {dimension_numbers = #tpu.dot_dimension_numbers<[1], [0], [0], [1], [0, 0, 1, 1], [], []>} : vector<272x27xbf16>, vector<27x128xbf16>, vector<272x128xf32> -> vector<272x128xf32>
    %c0_4 = arith.constant 0 : index
    %c0_5 = arith.constant 0 : index
    %4 = vector.load %arg4[%c0_4, %c0_5] : memref<1x128xf32, #tpu.memory_space<vmem>>, vector<1x128xf32>
    %5 = vector.broadcast %4 : vector<1x128xf32> to vector<272x128xf32>
    %6 = arith.mulf %3, %5 : vector<272x128xf32>
    %c0_6 = arith.constant 0 : index
    %c0_7 = arith.constant 0 : index
    %7 = vector.load %arg5[%c0_6, %c0_7] : memref<1x128xf32, #tpu.memory_space<vmem>>, vector<1x128xf32>
    %8 = vector.broadcast %7 : vector<1x128xf32> to vector<272x128xf32>
    %9 = arith.addf %6, %8 : vector<272x128xf32>
    %cst_8 = arith.constant 0.000000e+00 : f32
    %10 = vector.broadcast %cst_8 : f32 to vector<272x128xf32>
    %11 = arith.maximumf %9, %10 : vector<272x128xf32>
    %cst_9 = arith.constant 6.000000e+00 : f32
    %12 = vector.broadcast %cst_9 : f32 to vector<272x128xf32>
    %13 = arith.minimumf %11, %12 : vector<272x128xf32>
    %c0_10 = arith.constant 0 : index
    %c0_11 = arith.constant 0 : index
    %14 = vector.load %arg2[%c0_10, %c0_11] : memref<272x1xf32, #tpu.memory_space<vmem>>, vector<272x1xf32>
    %15 = vector.broadcast %14 : vector<272x1xf32> to vector<272x128xf32>
    %16 = arith.mulf %13, %15 : vector<272x128xf32>
    %17 = arith.truncf %16 : vector<272x128xf32> to vector<272x128xbf16>
    %c0_12 = arith.constant 0 : index
    %c0_13 = arith.constant 0 : index
    %c0_14 = arith.constant 0 : index
    %18 = vector.load %arg6[%c0_12, %c0_13, %c0_14] : memref<1x272x128xbf16, #tpu.memory_space<vmem>>, vector<1x272x128xbf16>
    %19 = vector.shape_cast %18 : vector<1x272x128xbf16> to vector<272x128xbf16>
    %20 = vector.shape_cast %17 : vector<272x128xbf16> to vector<1x272x128xbf16>
    tpu.vector_store %arg6[%c0_12, %c0_13, %c0_14], %20 {strides = array<i32>} : memref<1x272x128xbf16, #tpu.memory_space<vmem>>, vector<1x272x128xbf16>,
    return
  }
  func.func @transform_0(%arg0: i32) -> (i32, i32, i32) {
    %c0_i32 = arith.constant 0 : i32
    %c0_i32_0 = arith.constant 0 : i32
    %c0_i32_1 = arith.constant 0 : i32
    return %arg0, %c0_i32, %c0_i32_0 : i32, i32, i32
  }
  func.func @transform_1(%arg0: i32) -> (i32, i32) {
    %c0_i32 = arith.constant 0 : i32
    %c0_i32_0 = arith.constant 0 : i32
    %c0_i32_1 = arith.constant 0 : i32
    return %c0_i32, %c0_i32_0 : i32, i32
  }
  func.func @transform_2(%arg0: i32) -> (i32, i32) {
    %c0_i32 = arith.constant 0 : i32
    %c0_i32_0 = arith.constant 0 : i32
    %c0_i32_1 = arith.constant 0 : i32
    return %c0_i32, %c0_i32_0 : i32, i32
  }
  func.func @transform_3(%arg0: i32) -> (i32, i32) {
    %c0_i32 = arith.constant 0 : i32
    %c0_i32_0 = arith.constant 0 : i32
    %c0_i32_1 = arith.constant 0 : i32
    return %c0_i32, %c0_i32_0 : i32, i32
  }
  func.func @transform_4(%arg0: i32) -> (i32, i32) {
    %c0_i32 = arith.constant 0 : i32
    %c0_i32_0 = arith.constant 0 : i32
    %c0_i32_1 = arith.constant 0 : i32
    return %c0_i32, %c0_i32_0 : i32, i32
  }
  func.func @transform_5(%arg0: i32) -> (i32, i32, i32) {
    %c0_i32 = arith.constant 0 : i32
    %c0_i32_0 = arith.constant 0 : i32
    %c0_i32_1 = arith.constant 0 : i32
    return %arg0, %c0_i32, %c0_i32_0 : i32, i32, i32
  }
}

</mosaic_0001>

<llo_original>
// kernel: tpu_custom_call.1
$region0: #{tpu_custom_call.1}
  #allocation0 [shape = 'u32[]', space=smem, size = 0x4, offset = 0x4, fixed_abs, tag = 'smem constant byte address 0x4 - core index']
  #allocation1 [shape = 'u32[144,128]{1,0:T(1,128)}', space=vmem, size = 0x12000, scoped, tag = 'internal scratch']
  %s0 = inlined_call_operand.vmem [shape: bf16[2,272,27], index: 0, kind: input, shape index: {}]
  %s1 = inlined_call_operand.vmem [shape: f32[272,1], index: 1, kind: input, shape index: {}]
  %s2 = inlined_call_operand.vmem [shape: bf16[27,128], index: 2, kind: input, shape index: {}]
  %s3 = inlined_call_operand.vmem [shape: f32[1,128], index: 3, kind: input, shape index: {}]
  %s4 = inlined_call_operand.vmem [shape: f32[1,128], index: 4, kind: input, shape index: {}]
  %s5 = inlined_call_operand.hbm [shape: bf16[2,272,128], index: 5, kind: output, shape index: {}]
  %s6 = sld [smem:[#allocation0]]
  $region53: #{tpu_custom_call.1} parent=0
    _
  %s8 = ssub.s32 1, %s6
  %s9 = scalar_select 0, %s8, %s6
  $region1: #{tpu_custom_call.1} parent=0
    #allocation2 [shape = 'u8[139264]{0}', space=vmem, size = 0x22000, scoped, tag = 'output window, operand 0']
    #allocation3 [shape = 's32[2]{0}', space=sflag, size = 0x8, scoped, tag = 'scoped memory for tpu_custom_call.1']
    %10 = vsyncpa [#allocation3], 0
    %s11 = scalar_lea.sflag [#allocation3], 1
    %12 = vsyncpa %s11, 0
    loop: start=0, step=1, limit=4
    $region2: #{tpu_custom_call.1} parent=1 // loop_pre_header
      _
    $region3: #{tpu_custom_call.1} parent=1 // loop_header
      %s14 = sphi 0, %s18
      %p15 = scmp.ge.s32.totalorder %s14, 4
      %s24 = sphi 0, %s26
      %s27 = sphi 0, %s24
      %s28 = sphi 0, %s27
      %s44 = sphi 0, %s28
      %s48 = sphi 0, %s48
      %s50 = sphi 0, %s48
      %s51 = sphi 0, %s50
      %s65 = sphi 0, %s51
      %s69 = sphi 0, %s69
      %s71 = sphi 0, %s69
      %s72 = sphi 0, %s71
      %s86 = sphi 0, %s72
      %s90 = sphi 0, %s90
      %s92 = sphi 0, %s90
      %s93 = sphi 0, %s92
      %s107 = sphi 0, %s93
      %s111 = sphi 0, %s111
      %s113 = sphi 0, %s111
      %s114 = sphi 0, %s113
      %s128 = sphi 0, %s114
      %s134 = sphi 0, %s136
      %s137 = sphi 0, %s134
      %s138 = sphi 0, %s137
      %s154 = sphi 0, %s138
    $region4: #{tpu_custom_call.1} parent=1 // loop_header_branch
      %17 = sbr.rel (%p15) target = $region8
    $region5: #{tpu_custom_call.1} parent=1 // loop_body
      %s19 = ssub.s32 %s14, 1
      %s20 = ssub.s32 %s14, 2
      %s21 = sadd.s32 %s14, 1
      %s22 = ssub.s32 %s14, %s21
      %p23 = scmp.eq.s32.totalorder %s22, 0
      %s25 = sadd.s32 %s24, 1
      %s26 = scalar_select %p23, %s24, %s25
      %p29 = pneg %p23
      %p30 = scmp.eq.s32.totalorder %s14, 1
      %p31 = por %p29, %p30
      %p32 = scmp.ne.s32.totalorder %s24, %s27
      %p33 = scmp.eq.s32.totalorder %s14, 0
      %p34 = por %p32, %p33
      %p35 = scmp.ne.s32.totalorder %s24, %s27
      %p36 = scmp.eq.s32.totalorder %s19, 1
      %p37 = por %p35, %p36
      %p38 = scmp.ne.s32.totalorder %s27, %s28
      %p39 = scmp.eq.s32.totalorder %s19, 0
      %p40 = por %p38, %p39
      %p41 = scmp.ne.s32.totalorder %s27, %s28
      %p42 = scmp.eq.s32.totalorder %s20, 1
      %p43 = por %p41, %p42
      %p45 = scmp.ne.s32.totalorder %s28, %s44
      %p46 = scmp.eq.s32.totalorder %s20, 0
      %p47 = por %p45, %p46
      %s49 = sadd.s32 %s48, 1
      %p52 = scmp.eq.s32.totalorder %s14, 1
      %p53 = scmp.ne.s32.totalorder %s48, %s50
      %p54 = scmp.eq.s32.totalorder %s14, 0
      %p55 = por %p53, %p54
      %p56 = scmp.ne.s32.totalorder %s48, %s50
      %p57 = scmp.eq.s32.totalorder %s19, 1
      %p58 = por %p56, %p57
      %p59 = scmp.ne.s32.totalorder %s50, %s51
      %p60 = scmp.eq.s32.totalorder %s19, 0
      %p61 = por %p59, %p60
      %p62 = scmp.ne.s32.totalorder %s50, %s51
      %p63 = scmp.eq.s32.totalorder %s20, 1
      %p64 = por %p62, %p63
      %p66 = scmp.ne.s32.totalorder %s51, %s65
      %p67 = scmp.eq.s32.totalorder %s20, 0
      %p68 = por %p66, %p67
      %s70 = sadd.s32 %s69, 1
      %p73 = scmp.eq.s32.totalorder %s14, 1
      %p74 = scmp.ne.s32.totalorder %s69, %s71
      %p75 = scmp.eq.s32.totalorder %s14, 0
      %p76 = por %p74, %p75
      %p77 = scmp.ne.s32.totalorder %s69, %s71
      %p78 = scmp.eq.s32.totalorder %s19, 1
      %p79 = por %p77, %p78
      %p80 = scmp.ne.s32.totalorder %s71, %s72
      %p81 = scmp.eq.s32.totalorder %s19, 0
      %p82 = por %p80, %p81
      %p83 = scmp.ne.s32.totalorder %s71, %s72
      %p84 = scmp.eq.s32.totalorder %s20, 1
      %p85 = por %p83, %p84
      %p87 = scmp.ne.s32.totalorder %s72, %s86
      %p88 = scmp.eq.s32.totalorder %s20, 0
      %p89 = por %p87, %p88
      %s91 = sadd.s32 %s90, 1
      %p94 = scmp.eq.s32.totalorder %s14, 1
      %p95 = scmp.ne.s32.totalorder %s90, %s92
      %p96 = scmp.eq.s32.totalorder %s14, 0
      %p97 = por %p95, %p96
      %p98 = scmp.ne.s32.totalorder %s90, %s92
      %p99 = scmp.eq.s32.totalorder %s19, 1
      %p100 = por %p98, %p99
      %p101 = scmp.ne.s32.totalorder %s92, %s93
      %p102 = scmp.eq.s32.totalorder %s19, 0
      %p103 = por %p101, %p102
      %p104 = scmp.ne.s32.totalorder %s92, %s93
      %p105 = scmp.eq.s32.totalorder %s20, 1
      %p106 = por %p104, %p105
      %p108 = scmp.ne.s32.totalorder %s93, %s107
      %p109 = scmp.eq.s32.totalorder %s20, 0
      %p110 = por %p108, %p109
      %s112 = sadd.s32 %s111, 1
      %p115 = scmp.eq.s32.totalorder %s14, 1
      %p116 = scmp.ne.s32.totalorder %s111, %s113
      %p117 = scmp.eq.s32.totalorder %s14, 0
      %p118 = por %p116, %p117
      %p119 = scmp.ne.s32.totalorder %s111, %s113
      %p120 = scmp.eq.s32.totalorder %s19, 1
      %p121 = por %p119, %p120
      %p122 = scmp.ne.s32.totalorder %s113, %s114
      %p123 = scmp.eq.s32.totalorder %s19, 0
      %p124 = por %p122, %p123
      %p125 = scmp.ne.s32.totalorder %s113, %s114
      %p126 = scmp.eq.s32.totalorder %s20, 1
      %p127 = por %p125, %p126
      %p129 = scmp.ne.s32.totalorder %s114, %s128
      %p130 = scmp.eq.s32.totalorder %s20, 0
      %p131 = por %p129, %p130
      %s132 = ssub.s32 %s14, %s21
      %p133 = scmp.eq.s32.totalorder %s132, 0
      %s135 = sadd.s32 %s134, 1
      %s136 = scalar_select %p133, %s134, %s135
      %p139 = pneg %p133
      %p140 = scmp.eq.s32.totalorder %s14, 1
      %p141 = por %p139, %p140
      %p142 = scmp.ne.s32.totalorder %s134, %s137
      %p143 = scmp.eq.s32.totalorder %s14, 0
      %p144 = por %p142, %p143
      %p145 = scmp.ne.s32.totalorder %s134, %s137
      %p146 = scmp.eq.s32.totalorder %s19, 1
      %p147 = por %p145, %p146
      %p148 = scmp.ne.s32.totalorder %s137, %s138
      %p149 = scmp.eq.s32.totalorder %s19, 0
      %p150 = por %p148, %p149
      %p151 = scmp.ne.s32.totalorder %s137, %s138
      %p152 = scmp.eq.s32.totalorder %s20, 1
      %p153 = por %p151, %p152
      %p155 = scmp.ne.s32.totalorder %s138, %s154
      %p156 = scmp.eq.s32.totalorder %s20, 0
      %p157 = por %p155, %p156
      %p158 = scmp.le.s32.totalorder 1, %s14
      %p159 = scmp.lt.s32.totalorder %s14, 3
      %p160 = pnand %p158, %p159
      %p161 = pneg %p160
      // Predicated region
      $region9: #{tpu_custom_call.1} parent=5 // pred_check
        _
      $region10: #{tpu_custom_call.1} parent=5 // pred_check_branch
        %163 = sbr.rel (%p160) target = $region12
      $region11: #{tpu_custom_call.1} parent=5 // pred_region
        %s164 = ssub.s32 %s14, 1
        // Predicated region
        $region13: #{tpu_custom_call.1} parent=11 // pred_check
          %p165 = pneg %p61
        $region14: #{tpu_custom_call.1} parent=11 // pred_check_branch
          %167 = sbr.rel (%p165) target = $region16
        $region15: #{tpu_custom_call.1} parent=11 // pred_region
          _
        $region16: #{tpu_custom_call.1} parent=11 // pred_fallthru
          _
        // Predicated region
        $region17: #{tpu_custom_call.1} parent=11 // pred_check
          %p168 = pneg %p82
        $region18: #{tpu_custom_call.1} parent=11 // pred_check_branch
          %170 = sbr.rel (%p168) target = $region20
        $region19: #{tpu_custom_call.1} parent=11 // pred_region
          _
        $region20: #{tpu_custom_call.1} parent=11 // pred_fallthru
          _
        // Predicated region
        $region21: #{tpu_custom_call.1} parent=11 // pred_check
          %p171 = pneg %p103
        $region22: #{tpu_custom_call.1} parent=11 // pred_check_branch
          %173 = sbr.rel (%p171) target = $region24
        $region23: #{tpu_custom_call.1} parent=11 // pred_region
          _
        $region24: #{tpu_custom_call.1} parent=11 // pred_fallthru
          _
        // Predicated region
        $region25: #{tpu_custom_call.1} parent=11 // pred_check
          %p174 = pneg %p124
        $region26: #{tpu_custom_call.1} parent=11 // pred_check_branch
          %176 = sbr.rel (%p174) target = $region28
        $region27: #{tpu_custom_call.1} parent=11 // pred_region
          _
        $region28: #{tpu_custom_call.1} parent=11 // pred_fallthru
          _
      $region12: #{tpu_custom_call.1} parent=5 // pred_fallthru
        _
      %p177 = scmp.lt.s32.totalorder %s14, 2
      // Predicated region
      $region29: #{tpu_custom_call.1} parent=5 // pred_check
        %p178 = pneg %p177
      $region30: #{tpu_custom_call.1} parent=5 // pred_check_branch
        %180 = sbr.rel (%p178) target = $region32
      $region31: #{tpu_custom_call.1} parent=5 // pred_region
        // Predicated region
        $region33: #{tpu_custom_call.1} parent=31 // pred_check
          %p181 = pneg %p34
        $region34: #{tpu_custom_call.1} parent=31 // pred_check_branch
          %183 = sbr.rel (%p181) target = $region36
        $region35: #{tpu_custom_call.1} parent=31 // pred_region
          %p184 = scmp.lt.s32.totalorder %s14, 1
          %s185 = scalar_select %p184, %s14, 1
          %s186 = smul.addr %s185, 34
          %s187 = smul.addr %s186, 4
          %s188 = scalar_lea.vmem %s0, %s187
        $region36: #{tpu_custom_call.1} parent=31 // pred_fallthru
          _
      $region32: #{tpu_custom_call.1} parent=5 // pred_fallthru
        _
      %p189 = scmp.le.s32.totalorder 1, %s14
      %p190 = scmp.lt.s32.totalorder %s14, 3
      %p191 = pnand %p189, %p190
      %p192 = pneg %p191
      // Predicated region
      $region37: #{tpu_custom_call.1} parent=5 // pred_check
        _
      $region38: #{tpu_custom_call.1} parent=5 // pred_check_branch
        %194 = sbr.rel (%p191) target = $region40
      $region39: #{tpu_custom_call.1} parent=5 // pred_region
        %s195 = ssub.s32 %s14, 1
        %p196 = scmp.lt.s32.totalorder %s19, 1
        %s197 = scalar_select %p196, %s19, 1
        %s198 = smul.addr %s197, 34
        %s199 = smul.addr %s198, 4
        %s200 = scalar_lea.vmem %s0, %s199
        %p201 = pneg %p40
        %p202 = pneg %p37
        %p203 = pneg %p61
        %p204 = pneg %p58
        %p205 = pneg %p82
        %p206 = pneg %p79
        %p207 = pneg %p103
        %p208 = pneg %p100
        %p209 = pneg %p124
        %p210 = pneg %p121
        %p211 = pneg %p150
        %p212 = pneg %p147
        %s213 = sand.u32 %s137, 1
        %s214 = scalar_lea.sflag [#allocation3], %s213
        %s215 = sand.u32 %s137, 1
        %s216 = smul.addr %s215, 136
        %s217 = scalar_lea.vmem [#allocation2], %s216
        %p218 = scmp.lt.s32.totalorder %s19, 1
        %s219 = scalar_select %p218, %s19, 1
        %s220 = smul.addr %s219, 34
        %s221 = smul.addr %s220, 4
        %s222 = scalar_lea.vmem %s0, %s221
        %v224 = vld [vmem:[%s222] sm:$0xf]
        %v225 = vld [vmem:[%s222 + $0x4] sm:$0xf]
        %v226 = vld [vmem:[%s222 + $0x8] sm:$0xf]
        %v227 = vld [vmem:[%s222 + $0xc] sm:$0xf]
        %v228 = vld [vmem:[%s222 + $0x10] sm:$0xf]
        %v229 = vld [vmem:[%s222 + $0x14] sm:$0xf]
        %v230 = vld [vmem:[%s222 + $0x18] sm:$0xf]
        %v231 = vld [vmem:[%s222 + $0x1c] sm:$0xf]
        %v232 = vld [vmem:[%s222 + $0x20] sm:$0xf]
        %v233 = vld [vmem:[%s222 + $0x24] sm:$0xf]
        %v234 = vld [vmem:[%s222 + $0x28] sm:$0xf]
        %v235 = vld [vmem:[%s222 + $0x2c] sm:$0xf]
        %v236 = vld [vmem:[%s222 + $0x30] sm:$0xf]
        %v237 = vld [vmem:[%s222 + $0x34] sm:$0xf]
        %v238 = vld [vmem:[%s222 + $0x38] sm:$0xf]
        %v239 = vld [vmem:[%s222 + $0x3c] sm:$0xf]
        %v240 = vld [vmem:[%s222 + $0x40] sm:$0xf]
        %v241 = vld [vmem:[%s222 + $0x44] sm:$0xf]
        %v242 = vld [vmem:[%s222 + $0x48] sm:$0xf]
        %v243 = vld [vmem:[%s222 + $0x4c] sm:$0xf]
        %v244 = vld [vmem:[%s222 + $0x50] sm:$0xf]
        %v245 = vld [vmem:[%s222 + $0x54] sm:$0xf]
        %v246 = vld [vmem:[%s222 + $0x58] sm:$0xf]
        %v247 = vld [vmem:[%s222 + $0x5c] sm:$0xf]
        %v248 = vld [vmem:[%s222 + $0x60] sm:$0xf]
        %v249 = vld [vmem:[%s222 + $0x64] sm:$0xf]
        %v250 = vld [vmem:[%s222 + $0x68] sm:$0xf]
        %v251 = vld [vmem:[%s222 + $0x6c] sm:$0xf]
        %v252 = vld [vmem:[%s222 + $0x70] sm:$0xf]
        %v253 = vld [vmem:[%s222 + $0x74] sm:$0xf]
        %v254 = vld [vmem:[%s222 + $0x78] sm:$0xf]
        %v255 = vld [vmem:[%s222 + $0x7c] sm:$0xf]
        %v256 = vld [vmem:[%s222 + $0x80] sm:$0xf]
        %v257 = vld [vmem:[%s222 + $0x84] sm:$0xf]
        %v258 = vld [vmem:[%s2] sm:$0xf]
        %v259 = vld [vmem:[%s2 + $0x4] sm:$0xf]
        %v260 = vld [vmem:[%s2 + $0x8] sm:$0xf]
        %v261 = vld [vmem:[%s2 + $0xc] sm:$0x3]
        %v296 = vunpack.c.l.b16 %v224
        %v297 = vunpack.c.l.b16 %v225
        %v298 = vunpack.c.l.b16 %v226
        %v299 = vunpack.c.l.b16 %v227
        %v300 = vunpack.c.l.b16 %v228
        %v301 = vunpack.c.l.b16 %v229
        %v302 = vunpack.c.l.b16 %v230
        %v303 = vunpack.c.l.b16 %v231
        %v304 = vunpack.c.l.b16 %v232
        %v305 = vunpack.c.l.b16 %v233
        %v306 = vunpack.c.l.b16 %v234
        %v307 = vunpack.c.l.b16 %v235
        %v308 = vunpack.c.l.b16 %v236
        %v309 = vunpack.c.l.b16 %v237
        %v310 = vunpack.c.l.b16 %v238
        %v311 = vunpack.c.l.b16 %v239
        %v312 = vunpack.c.l.b16 %v240
        %v313 = vunpack.c.l.b16 %v241
        %v314 = vunpack.c.l.b16 %v242
        %v315 = vunpack.c.l.b16 %v243
        %v316 = vunpack.c.l.b16 %v244
        %v317 = vunpack.c.l.b16 %v245
        %v318 = vunpack.c.l.b16 %v246
        %v319 = vunpack.c.l.b16 %v247
        %v320 = vunpack.c.l.b16 %v248
        %v321 = vunpack.c.l.b16 %v249
        %v322 = vunpack.c.l.b16 %v250
        %v323 = vunpack.c.l.b16 %v251
        %v324 = vunpack.c.l.b16 %v252
        %v325 = vunpack.c.l.b16 %v253
        %v326 = vunpack.c.l.b16 %v254
        %v327 = vunpack.c.l.b16 %v255
        %v328 = vunpack.c.l.b16 %v256
        %v329 = vunpack.c.l.b16 %v257
        %v330 = vpack.c.b16 %v297, %v296
        %v331 = vpack.c.b16 %v299, %v298
        %v332 = vpack.c.b16 %v301, %v300
        %v333 = vpack.c.b16 %v303, %v302
        %v334 = vpack.c.b16 %v305, %v304
        %v335 = vpack.c.b16 %v307, %v306
        %v336 = vpack.c.b16 %v309, %v308
        %v337 = vpack.c.b16 %v311, %v310
        %v338 = vpack.c.b16 %v313, %v312
        %v339 = vpack.c.b16 %v315, %v314
        %v340 = vpack.c.b16 %v317, %v316
        %v341 = vpack.c.b16 %v319, %v318
        %v342 = vpack.c.b16 %v321, %v320
        %v343 = vpack.c.b16 %v323, %v322
        %v344 = vpack.c.b16 %v325, %v324
        %v345 = vpack.c.b16 %v327, %v326
        %v346 = vpack.c.b16 %v329, %v328
        %v351 = vunpack.c.l.b16 %v258
        %v352 = vunpack.c.l.b16 %v259
        %v353 = vunpack.c.l.b16 %v260
        %v354 = vunpack.c.l.b16 %v261
        %v355 = vpack.c.b16 %v352, %v351
        %v356 = vpack.c.b16 %v354, %v353
        %vm358 = vcmask 220160
        %v360 = vsel %vm358, %v330, 0
        %v363 = vsel %vm358, %v331, 0
        %v366 = vsel %vm358, %v332, 0
        %v369 = vsel %vm358, %v333, 0
        %v372 = vsel %vm358, %v334, 0
        %v375 = vsel %vm358, %v335, 0
        %v378 = vsel %vm358, %v336, 0
        %v381 = vsel %vm358, %v337, 0
        %v384 = vsel %vm358, %v338, 0
        %v387 = vsel %vm358, %v339, 0
        %v390 = vsel %vm358, %v340, 0
        %v393 = vsel %vm358, %v341, 0
        %v396 = vsel %vm358, %v342, 0
        %v399 = vsel %vm358, %v343, 0
        %v402 = vsel %vm358, %v344, 0
        %v405 = vsel %vm358, %v345, 0
        %v408 = vsel %vm358, %v346, 0
        %vm410 = vcmask 1044480
        %vm411 = vcmask 1045504
        %v412 = vsel %vm410, 4294967295, 65535
        %v413 = vsel %vm411, %v412, 0
        %v415 = vand.u32 %v356, %v413
        %417 = vmatprep.subr.bf16.mxu0 0
        %418 = vmatpush1.bf16.msra.mxu0 %v355
        %419 = vmatprep.subr.bf16.mxu0 0
        %420 = vmatpush1.bf16.msra.mxu0 %v415
        %421 = vmatprep.subr.bf16.mxu0 0
        %422 = vmatpush1.bf16.msra.mxu0 0
        %423 = vmatprep.subr.bf16.mxu0 0
        %424 = vmatpush1.bf16.msra.mxu0 0
        %425 = vmatprep.subr.bf16.mxu0 0
        %426 = vmatpush1.bf16.msra.mxu0 0
        %427 = vmatprep.subr.bf16.mxu0 0
        %428 = vmatpush1.bf16.msra.mxu0 0
        %429 = vmatprep.subr.bf16.mxu0 0
        %430 = vmatpush1.bf16.msra.mxu0 0
        %431 = vmatprep.subr.bf16.mxu0 0
        %432 = vmatpush1.bf16.msra.mxu0 0
        %433 = vmatprep.subr.bf16.mxu0 0
        %434 = vmatpush1.bf16.msra.mxu0 0
        %435 = vmatprep.subr.bf16.mxu0 0
        %436 = vmatpush1.bf16.msra.mxu0 0
        %437 = vmatprep.subr.bf16.mxu0 0
        %438 = vmatpush1.bf16.msra.mxu0 0
        %439 = vmatprep.subr.bf16.mxu0 0
        %440 = vmatpush1.bf16.msra.mxu0 0
        %441 = vmatprep.subr.bf16.mxu0 0
        %442 = vmatpush1.bf16.msra.mxu0 0
        %443 = vmatprep.subr.bf16.mxu0 0
        %444 = vmatpush1.bf16.msra.mxu0 0
        %445 = vmatprep.subr.bf16.mxu0 0
        %446 = vmatpush1.bf16.msra.mxu0 0
        %447 = vmatprep.subr.bf16.mxu0 0
        %448 = vmatpush1.bf16.msra.mxu0 0
        %449 = vmatprep.mubr.bf16.mxu0 0
        %450 = vmatmul.mubr.bf16.gmra.mrb[0].mxu0 %v360
        %v451 = vpop.f32.mrb[0].mxu0
        %v452 = vadd.f32 0.0, %v451
        %v453 = vpop.f32.mrb[0].mxu0
        %v454 = vpop.f32.mrb[0].mxu0
        %v455 = vadd.f32 0.0, %v454
        %v456 = vpop.f32.mrb[0].mxu0
        %457 = vmatprep.mubr.bf16.mxu0 0
        %458 = vmatmul.mubr.bf16.gmra.mrb[0].mxu0 %v363
        %v459 = vpop.f32.mrb[0].mxu0
        %v460 = vadd.f32 0.0, %v459
        %v461 = vpop.f32.mrb[0].mxu0
        %v462 = vpop.f32.mrb[0].mxu0
        %v463 = vadd.f32 0.0, %v462
        %v464 = vpop.f32.mrb[0].mxu0
        %465 = vmatprep.mubr.bf16.mxu0 0
        %466 = vmatmul.mubr.bf16.gmra.mrb[0].mxu0 %v366
        %v467 = vpop.f32.mrb[0].mxu0
        %v468 = vadd.f32 0.0, %v467
        %v469 = vpop.f32.mrb[0].mxu0
        %v470 = vpop.f32.mrb[0].mxu0
        %v471 = vadd.f32 0.0, %v470
        %v472 = vpop.f32.mrb[0].mxu0
        %473 = vmatprep.mubr.bf16.mxu0 0
        %474 = vmatmul.mubr.bf16.gmra.mrb[0].mxu0 %v369
        %v475 = vpop.f32.mrb[0].mxu0
        %v476 = vadd.f32 0.0, %v475
        %v477 = vpop.f32.mrb[0].mxu0
        %v478 = vpop.f32.mrb[0].mxu0
        %v479 = vadd.f32 0.0, %v478
        %v480 = vpop.f32.mrb[0].mxu0
        %481 = vmatprep.mubr.bf16.mxu0 0
        %482 = vmatmul.mubr.bf16.gmra.mrb[0].mxu0 %v372
        %v483 = vpop.f32.mrb[0].mxu0
        %v484 = vadd.f32 0.0, %v483
        %v485 = vpop.f32.mrb[0].mxu0
        %v486 = vpop.f32.mrb[0].mxu0
        %v487 = vadd.f32 0.0, %v486
        %v488 = vpop.f32.mrb[0].mxu0
        %489 = vmatprep.mubr.bf16.mxu0 0
        %490 = vmatmul.mubr.bf16.gmra.mrb[0].mxu0 %v375
        %v491 = vpop.f32.mrb[0].mxu0
        %v492 = vadd.f32 0.0, %v491
        %v493 = vpop.f32.mrb[0].mxu0
        %v494 = vpop.f32.mrb[0].mxu0
        %v495 = vadd.f32 0.0, %v494
        %v496 = vpop.f32.mrb[0].mxu0
        %497 = vmatprep.mubr.bf16.mxu0 0
        %498 = vmatmul.mubr.bf16.gmra.mrb[0].mxu0 %v378
        %v499 = vpop.f32.mrb[0].mxu0
        %v500 = vadd.f32 0.0, %v499
        %v501 = vpop.f32.mrb[0].mxu0
        %v502 = vpop.f32.mrb[0].mxu0
        %v503 = vadd.f32 0.0, %v502
        %v504 = vpop.f32.mrb[0].mxu0
        %505 = vmatprep.mubr.bf16.mxu0 0
        %506 = vmatmul.mubr.bf16.gmra.mrb[0].mxu0 %v381
        %v507 = vpop.f32.mrb[0].mxu0
        %v508 = vadd.f32 0.0, %v507
        %v509 = vpop.f32.mrb[0].mxu0
        %v510 = vpop.f32.mrb[0].mxu0
        %v511 = vadd.f32 0.0, %v510
        %v512 = vpop.f32.mrb[0].mxu0
        %513 = vmatprep.mubr.bf16.mxu0 0
        %514 = vmatmul.mubr.bf16.gmra.mrb[0].mxu0 %v384
        %v515 = vpop.f32.mrb[0].mxu0
        %v516 = vadd.f32 0.0, %v515
        %v517 = vpop.f32.mrb[0].mxu0
        %v518 = vpop.f32.mrb[0].mxu0
        %v519 = vadd.f32 0.0, %v518
        %v520 = vpop.f32.mrb[0].mxu0
        %521 = vmatprep.mubr.bf16.mxu0 0
        %522 = vmatmul.mubr.bf16.gmra.mrb[0].mxu0 %v387
        %v523 = vpop.f32.mrb[0].mxu0
        %v524 = vadd.f32 0.0, %v523
        %v525 = vpop.f32.mrb[0].mxu0
        %v526 = vpop.f32.mrb[0].mxu0
        %v527 = vadd.f32 0.0, %v526
        %v528 = vpop.f32.mrb[0].mxu0
        %529 = vmatprep.mubr.bf16.mxu0 0
        %530 = vmatmul.mubr.bf16.gmra.mrb[0].mxu0 %v390
        %v531 = vpop.f32.mrb[0].mxu0
        %v532 = vadd.f32 0.0, %v531
        %v533 = vpop.f32.mrb[0].mxu0
        %v534 = vpop.f32.mrb[0].mxu0
        %v535 = vadd.f32 0.0, %v534
        %v536 = vpop.f32.mrb[0].mxu0
        %537 = vmatprep.mubr.bf16.mxu0 0
        %538 = vmatmul.mubr.bf16.gmra.mrb[0].mxu0 %v393
        %v539 = vpop.f32.mrb[0].mxu0
        %v540 = vadd.f32 0.0, %v539
        %v541 = vpop.f32.mrb[0].mxu0
        %v542 = vpop.f32.mrb[0].mxu0
        %v543 = vadd.f32 0.0, %v542
        %v544 = vpop.f32.mrb[0].mxu0
        %545 = vmatprep.mubr.bf16.mxu0 0
        %546 = vmatmul.mubr.bf16.gmra.mrb[0].mxu0 %v396
        %v547 = vpop.f32.mrb[0].mxu0
        %v548 = vadd.f32 0.0, %v547
        %v549 = vpop.f32.mrb[0].mxu0
        %v550 = vpop.f32.mrb[0].mxu0
        %v551 = vadd.f32 0.0, %v550
        %v552 = vpop.f32.mrb[0].mxu0
        %553 = vmatprep.mubr.bf16.mxu0 0
        %554 = vmatmul.mubr.bf16.gmra.mrb[0].mxu0 %v399
        %v555 = vpop.f32.mrb[0].mxu0
        %v556 = vadd.f32 0.0, %v555
        %v557 = vpop.f32.mrb[0].mxu0
        %v558 = vpop.f32.mrb[0].mxu0
        %v559 = vadd.f32 0.0, %v558
        %v560 = vpop.f32.mrb[0].mxu0
        %561 = vmatprep.mubr.bf16.mxu0 0
        %562 = vmatmul.mubr.bf16.gmra.mrb[0].mxu0 %v402
        %v563 = vpop.f32.mrb[0].mxu0
        %v564 = vadd.f32 0.0, %v563
        %v565 = vpop.f32.mrb[0].mxu0
        %v566 = vpop.f32.mrb[0].mxu0
        %v567 = vadd.f32 0.0, %v566
        %v568 = vpop.f32.mrb[0].mxu0
        %569 = vmatprep.mubr.bf16.mxu0 0
        %570 = vmatmul.mubr.bf16.gmra.mrb[0].mxu0 %v405
        %v571 = vpop.f32.mrb[0].mxu0
        %v572 = vadd.f32 0.0, %v571
        %v573 = vpop.f32.mrb[0].mxu0
        %v574 = vpop.f32.mrb[0].mxu0
        %v575 = vadd.f32 0.0, %v574
        %v576 = vpop.f32.mrb[0].mxu0
        %577 = vmatprep.mubr.bf16.mxu0 0
        %578 = vmatmul.mubr.bf16.gmra.mrb[0].mxu0 %v408
        %v579 = vpop.f32.mrb[0].mxu0
        %v580 = vadd.f32 0.0, %v579
        %v581 = vpop.f32.mrb[0].mxu0
        %v582 = vpop.f32.mrb[0].mxu0
        %v583 = vadd.f32 0.0, %v582
        %v584 = vpop.f32.mrb[0].mxu0
        %585 = vdwg.mxu0
        %v586 = vld [vmem:[%s3] sm:$0x1]
        %v588 = vlaneseq
        %v589 = vshrl.u32 %v588, 7
        %v590 = vsub.s32 0, %v589
        %v591 = vrot.slane %v586, %v590
        %v593 = vmul.f32 %v452, %v591
        %v594 = vmul.f32 %v455, %v591
        %v595 = vmul.f32 %v460, %v591
        %v596 = vmul.f32 %v463, %v591
        %v597 = vmul.f32 %v468, %v591
        %v598 = vmul.f32 %v471, %v591
        %v599 = vmul.f32 %v476, %v591
        %v600 = vmul.f32 %v479, %v591
        %v601 = vmul.f32 %v484, %v591
        %v602 = vmul.f32 %v487, %v591
        %v603 = vmul.f32 %v492, %v591
        %v604 = vmul.f32 %v495, %v591
        %v605 = vmul.f32 %v500, %v591
        %v606 = vmul.f32 %v503, %v591
        %v607 = vmul.f32 %v508, %v591
        %v608 = vmul.f32 %v511, %v591
        %v609 = vmul.f32 %v516, %v591
        %v610 = vmul.f32 %v519, %v591
        %v611 = vmul.f32 %v524, %v591
        %v612 = vmul.f32 %v527, %v591
        %v613 = vmul.f32 %v532, %v591
        %v614 = vmul.f32 %v535, %v591
        %v615 = vmul.f32 %v540, %v591
        %v616 = vmul.f32 %v543, %v591
        %v617 = vmul.f32 %v548, %v591
        %v618 = vmul.f32 %v551, %v591
        %v619 = vmul.f32 %v556, %v591
        %v620 = vmul.f32 %v559, %v591
        %v621 = vmul.f32 %v564, %v591
        %v622 = vmul.f32 %v567, %v591
        %v623 = vmul.f32 %v572, %v591
        %v624 = vmul.f32 %v575, %v591
        %v625 = vmul.f32 %v580, %v591
        %v626 = vmul.f32 %v583, %v591
        %v627 = vld [vmem:[%s4] sm:$0x1]
        %v629 = vlaneseq
        %v630 = vshrl.u32 %v629, 7
        %v631 = vsub.s32 0, %v630
        %v632 = vrot.slane %v627, %v631
        %v634 = vadd.f32 %v593, %v632
        %v635 = vadd.f32 %v594, %v632
        %v636 = vadd.f32 %v595, %v632
        %v637 = vadd.f32 %v596, %v632
        %v638 = vadd.f32 %v597, %v632
        %v639 = vadd.f32 %v598, %v632
        %v640 = vadd.f32 %v599, %v632
        %v641 = vadd.f32 %v600, %v632
        %v642 = vadd.f32 %v601, %v632
        %v643 = vadd.f32 %v602, %v632
        %v644 = vadd.f32 %v603, %v632
        %v645 = vadd.f32 %v604, %v632
        %v646 = vadd.f32 %v605, %v632
        %v647 = vadd.f32 %v606, %v632
        %v648 = vadd.f32 %v607, %v632
        %v649 = vadd.f32 %v608, %v632
        %v650 = vadd.f32 %v609, %v632
        %v651 = vadd.f32 %v610, %v632
        %v652 = vadd.f32 %v611, %v632
        %v653 = vadd.f32 %v612, %v632
        %v654 = vadd.f32 %v613, %v632
        %v655 = vadd.f32 %v614, %v632
        %v656 = vadd.f32 %v615, %v632
        %v657 = vadd.f32 %v616, %v632
        %v658 = vadd.f32 %v617, %v632
        %v659 = vadd.f32 %v618, %v632
        %v660 = vadd.f32 %v619, %v632
        %v661 = vadd.f32 %v620, %v632
        %v662 = vadd.f32 %v621, %v632
        %v663 = vadd.f32 %v622, %v632
        %v664 = vadd.f32 %v623, %v632
        %v665 = vadd.f32 %v624, %v632
        %v666 = vadd.f32 %v625, %v632
        %v667 = vadd.f32 %v626, %v632
        %v668 = vmax.f32 %v634, 0.0
        %v669 = vmax.f32 %v635, 0.0
        %v670 = vmax.f32 %v636, 0.0
        %v671 = vmax.f32 %v637, 0.0
        %v672 = vmax.f32 %v638, 0.0
        %v673 = vmax.f32 %v639, 0.0
        %v674 = vmax.f32 %v640, 0.0
        %v675 = vmax.f32 %v641, 0.0
        %v676 = vmax.f32 %v642, 0.0
        %v677 = vmax.f32 %v643, 0.0
        %v678 = vmax.f32 %v644, 0.0
        %v679 = vmax.f32 %v645, 0.0
        %v680 = vmax.f32 %v646, 0.0
        %v681 = vmax.f32 %v647, 0.0
        %v682 = vmax.f32 %v648, 0.0
        %v683 = vmax.f32 %v649, 0.0
        %v684 = vmax.f32 %v650, 0.0
        %v685 = vmax.f32 %v651, 0.0
        %v686 = vmax.f32 %v652, 0.0
        %v687 = vmax.f32 %v653, 0.0
        %v688 = vmax.f32 %v654, 0.0
        %v689 = vmax.f32 %v655, 0.0
        %v690 = vmax.f32 %v656, 0.0
        %v691 = vmax.f32 %v657, 0.0
        %v692 = vmax.f32 %v658, 0.0
        %v693 = vmax.f32 %v659, 0.0
        %v694 = vmax.f32 %v660, 0.0
        %v695 = vmax.f32 %v661, 0.0
        %v696 = vmax.f32 %v662, 0.0
        %v697 = vmax.f32 %v663, 0.0
        %v698 = vmax.f32 %v664, 0.0
        %v699 = vmax.f32 %v665, 0.0
        %v700 = vmax.f32 %v666, 0.0
        %v701 = vmax.f32 %v667, 0.0
        %v702 = vmin.f32 %v668, 6.0
        %v703 = vmin.f32 %v669, 6.0
        %v704 = vmin.f32 %v670, 6.0
        %v705 = vmin.f32 %v671, 6.0
        %v706 = vmin.f32 %v672, 6.0
        %v707 = vmin.f32 %v673, 6.0
        %v708 = vmin.f32 %v674, 6.0
        %v709 = vmin.f32 %v675, 6.0
        %v710 = vmin.f32 %v676, 6.0
        %v711 = vmin.f32 %v677, 6.0
        %v712 = vmin.f32 %v678, 6.0
        %v713 = vmin.f32 %v679, 6.0
        %v714 = vmin.f32 %v680, 6.0
        %v715 = vmin.f32 %v681, 6.0
        %v716 = vmin.f32 %v682, 6.0
        %v717 = vmin.f32 %v683, 6.0
        %v718 = vmin.f32 %v684, 6.0
        %v719 = vmin.f32 %v685, 6.0
        %v720 = vmin.f32 %v686, 6.0
        %v721 = vmin.f32 %v687, 6.0
        %v722 = vmin.f32 %v688, 6.0
        %v723 = vmin.f32 %v689, 6.0
        %v724 = vmin.f32 %v690, 6.0
        %v725 = vmin.f32 %v691, 6.0
        %v726 = vmin.f32 %v692, 6.0
        %v727 = vmin.f32 %v693, 6.0
        %v728 = vmin.f32 %v694, 6.0
        %v729 = vmin.f32 %v695, 6.0
        %v730 = vmin.f32 %v696, 6.0
        %v731 = vmin.f32 %v697, 6.0
        %v732 = vmin.f32 %v698, 6.0
        %v733 = vmin.f32 %v699, 6.0
        %v734 = vmin.f32 %v700, 6.0
        %v735 = vmin.f32 %v701, 6.0
        %v736 = vld [vmem:[%s1] sm:$0xff]
        %v737 = vld [vmem:[%s1 + $0x8] sm:$0xff]
        %v738 = vld [vmem:[%s1 + $0x10] sm:$0xff]
        %v739 = vld [vmem:[%s1 + $0x18] sm:$0xff]
        %v740 = vld [vmem:[%s1 + $0x20] sm:$0xff]
        %v741 = vld [vmem:[%s1 + $0x28] sm:$0xff]
        %v742 = vld [vmem:[%s1 + $0x30] sm:$0xff]
        %v743 = vld [vmem:[%s1 + $0x38] sm:$0xff]
        %v744 = vld [vmem:[%s1 + $0x40] sm:$0xff]
        %v745 = vld [vmem:[%s1 + $0x48] sm:$0xff]
        %v746 = vld [vmem:[%s1 + $0x50] sm:$0xff]
        %v747 = vld [vmem:[%s1 + $0x58] sm:$0xff]
        %v748 = vld [vmem:[%s1 + $0x60] sm:$0xff]
        %v749 = vld [vmem:[%s1 + $0x68] sm:$0xff]
        %v750 = vld [vmem:[%s1 + $0x70] sm:$0xff]
        %v751 = vld [vmem:[%s1 + $0x78] sm:$0xff]
        %v752 = vld [vmem:[%s1 + $0x80] sm:$0xff]
        %v753 = vld [vmem:[%s1 + $0x88] sm:$0xff]
        %v754 = vld [vmem:[%s1 + $0x90] sm:$0xff]
        %v755 = vld [vmem:[%s1 + $0x98] sm:$0xff]
        %v756 = vld [vmem:[%s1 + $0xa0] sm:$0xff]
        %v757 = vld [vmem:[%s1 + $0xa8] sm:$0xff]
        %v758 = vld [vmem:[%s1 + $0xb0] sm:$0xff]
        %v759 = vld [vmem:[%s1 + $0xb8] sm:$0xff]
        %v760 = vld [vmem:[%s1 + $0xc0] sm:$0xff]
        %v761 = vld [vmem:[%s1 + $0xc8] sm:$0xff]
        %v762 = vld [vmem:[%s1 + $0xd0] sm:$0xff]
        %v763 = vld [vmem:[%s1 + $0xd8] sm:$0xff]
        %v764 = vld [vmem:[%s1 + $0xe0] sm:$0xff]
        %v765 = vld [vmem:[%s1 + $0xe8] sm:$0xff]
        %v766 = vld [vmem:[%s1 + $0xf0] sm:$0xff]
        %v767 = vld [vmem:[%s1 + $0xf8] sm:$0xff]
        %v768 = vld [vmem:[%s1 + $0x100] sm:$0xff]
        %v769 = vld [vmem:[%s1 + $0x108] sm:$0xff]
        %771 = vset.pattern.permute.xlu0 0
        %772 = vperm.xlu0 %771, %v736
        %v773 = vpop.permute.xlu0 %772
        %776 = vset.pattern.permute.xlu0 0
        %777 = vperm.xlu0 %776, %v737
        %v778 = vpop.permute.xlu0 %777
        %781 = vset.pattern.permute.xlu0 0
        %782 = vperm.xlu0 %781, %v738
        %v783 = vpop.permute.xlu0 %782
        %786 = vset.pattern.permute.xlu0 0
        %787 = vperm.xlu0 %786, %v739
        %v788 = vpop.permute.xlu0 %787
        %791 = vset.pattern.permute.xlu0 0
        %792 = vperm.xlu0 %791, %v740
        %v793 = vpop.permute.xlu0 %792
        %796 = vset.pattern.permute.xlu0 0
        %797 = vperm.xlu0 %796, %v741
        %v798 = vpop.permute.xlu0 %797
        %801 = vset.pattern.permute.xlu0 0
        %802 = vperm.xlu0 %801, %v742
        %v803 = vpop.permute.xlu0 %802
        %806 = vset.pattern.permute.xlu0 0
        %807 = vperm.xlu0 %806, %v743
        %v808 = vpop.permute.xlu0 %807
        %811 = vset.pattern.permute.xlu0 0
        %812 = vperm.xlu0 %811, %v744
        %v813 = vpop.permute.xlu0 %812
        %816 = vset.pattern.permute.xlu0 0
        %817 = vperm.xlu0 %816, %v745
        %v818 = vpop.permute.xlu0 %817
        %821 = vset.pattern.permute.xlu0 0
        %822 = vperm.xlu0 %821, %v746
        %v823 = vpop.permute.xlu0 %822
        %826 = vset.pattern.permute.xlu0 0
        %827 = vperm.xlu0 %826, %v747
        %v828 = vpop.permute.xlu0 %827
        %831 = vset.pattern.permute.xlu0 0
        %832 = vperm.xlu0 %831, %v748
        %v833 = vpop.permute.xlu0 %832
        %836 = vset.pattern.permute.xlu0 0
        %837 = vperm.xlu0 %836, %v749
        %v838 = vpop.permute.xlu0 %837
        %841 = vset.pattern.permute.xlu0 0
        %842 = vperm.xlu0 %841, %v750
        %v843 = vpop.permute.xlu0 %842
        %846 = vset.pattern.permute.xlu0 0
        %847 = vperm.xlu0 %846, %v751
        %v848 = vpop.permute.xlu0 %847
        %851 = vset.pattern.permute.xlu0 0
        %852 = vperm.xlu0 %851, %v752
        %v853 = vpop.permute.xlu0 %852
        %856 = vset.pattern.permute.xlu0 0
        %857 = vperm.xlu0 %856, %v753
        %v858 = vpop.permute.xlu0 %857
        %861 = vset.pattern.permute.xlu0 0
        %862 = vperm.xlu0 %861, %v754
        %v863 = vpop.permute.xlu0 %862
        %866 = vset.pattern.permute.xlu0 0
        %867 = vperm.xlu0 %866, %v755
        %v868 = vpop.permute.xlu0 %867
        %871 = vset.pattern.permute.xlu0 0
        %872 = vperm.xlu0 %871, %v756
        %v873 = vpop.permute.xlu0 %872
        %876 = vset.pattern.permute.xlu0 0
        %877 = vperm.xlu0 %876, %v757
        %v878 = vpop.permute.xlu0 %877
        %881 = vset.pattern.permute.xlu0 0
        %882 = vperm.xlu0 %881, %v758
        %v883 = vpop.permute.xlu0 %882
        %886 = vset.pattern.permute.xlu0 0
        %887 = vperm.xlu0 %886, %v759
        %v888 = vpop.permute.xlu0 %887
        %891 = vset.pattern.permute.xlu0 0
        %892 = vperm.xlu0 %891, %v760
        %v893 = vpop.permute.xlu0 %892
        %896 = vset.pattern.permute.xlu0 0
        %897 = vperm.xlu0 %896, %v761
        %v898 = vpop.permute.xlu0 %897
        %901 = vset.pattern.permute.xlu0 0
        %902 = vperm.xlu0 %901, %v762
        %v903 = vpop.permute.xlu0 %902
        %906 = vset.pattern.permute.xlu0 0
        %907 = vperm.xlu0 %906, %v763
        %v908 = vpop.permute.xlu0 %907
        %911 = vset.pattern.permute.xlu0 0
        %912 = vperm.xlu0 %911, %v764
        %v913 = vpop.permute.xlu0 %912
        %916 = vset.pattern.permute.xlu0 0
        %917 = vperm.xlu0 %916, %v765
        %v918 = vpop.permute.xlu0 %917
        %921 = vset.pattern.permute.xlu0 0
        %922 = vperm.xlu0 %921, %v766
        %v923 = vpop.permute.xlu0 %922
        %926 = vset.pattern.permute.xlu0 0
        %927 = vperm.xlu0 %926, %v767
        %v928 = vpop.permute.xlu0 %927
        %931 = vset.pattern.permute.xlu0 0
        %932 = vperm.xlu0 %931, %v768
        %v933 = vpop.permute.xlu0 %932
        %936 = vset.pattern.permute.xlu0 0
        %937 = vperm.xlu0 %936, %v769
        %v938 = vpop.permute.xlu0 %937
        %v940 = vmul.f32 %v702, %v773
        %v941 = vmul.f32 %v703, %v778
        %v942 = vmul.f32 %v704, %v783
        %v943 = vmul.f32 %v705, %v788
        %v944 = vmul.f32 %v706, %v793
        %v945 = vmul.f32 %v707, %v798
        %v946 = vmul.f32 %v708, %v803
        %v947 = vmul.f32 %v709, %v808
        %v948 = vmul.f32 %v710, %v813
        %v949 = vmul.f32 %v711, %v818
        %v950 = vmul.f32 %v712, %v823
        %v951 = vmul.f32 %v713, %v828
        %v952 = vmul.f32 %v714, %v833
        %v953 = vmul.f32 %v715, %v838
        %v954 = vmul.f32 %v716, %v843
        %v955 = vmul.f32 %v717, %v848
        %v956 = vmul.f32 %v718, %v853
        %v957 = vmul.f32 %v719, %v858
        %v958 = vmul.f32 %v720, %v863
        %v959 = vmul.f32 %v721, %v868
        %v960 = vmul.f32 %v722, %v873
        %v961 = vmul.f32 %v723, %v878
        %v962 = vmul.f32 %v724, %v883
        %v963 = vmul.f32 %v725, %v888
        %v964 = vmul.f32 %v726, %v893
        %v965 = vmul.f32 %v727, %v898
        %v966 = vmul.f32 %v728, %v903
        %v967 = vmul.f32 %v729, %v908
        %v968 = vmul.f32 %v730, %v913
        %v969 = vmul.f32 %v731, %v918
        %v970 = vmul.f32 %v732, %v923
        %v971 = vmul.f32 %v733, %v928
        %v972 = vmul.f32 %v734, %v933
        %v973 = vmul.f32 %v735, %v938
        %v974 = vpack.c.bf16 %v941, %v940
        %v975 = vpack.c.bf16 %v943, %v942
        %v976 = vpack.c.bf16 %v945, %v944
        %v977 = vpack.c.bf16 %v947, %v946
        %v978 = vpack.c.bf16 %v949, %v948
        %v979 = vpack.c.bf16 %v951, %v950
        %v980 = vpack.c.bf16 %v953, %v952
        %v981 = vpack.c.bf16 %v955, %v954
        %v982 = vpack.c.bf16 %v957, %v956
        %v983 = vpack.c.bf16 %v959, %v958
        %v984 = vpack.c.bf16 %v961, %v960
        %v985 = vpack.c.bf16 %v963, %v962
        %v986 = vpack.c.bf16 %v965, %v964
        %v987 = vpack.c.bf16 %v967, %v966
        %v988 = vpack.c.bf16 %v969, %v968
        %v989 = vpack.c.bf16 %v971, %v970
        %v990 = vpack.c.bf16 %v973, %v972
        %v1008 = vunpack.c.l.b16 %v974
        %v1009 = vunpack.c.h.b16 %v974
        %v1010 = vunpack.c.l.b16 %v975
        %v1011 = vunpack.c.h.b16 %v975
        %v1012 = vunpack.c.l.b16 %v976
        %v1013 = vunpack.c.h.b16 %v976
        %v1014 = vunpack.c.l.b16 %v977
        %v1015 = vunpack.c.h.b16 %v977
        %v1016 = vunpack.c.l.b16 %v978
        %v1017 = vunpack.c.h.b16 %v978
        %v1018 = vunpack.c.l.b16 %v979
        %v1019 = vunpack.c.h.b16 %v979
        %v1020 = vunpack.c.l.b16 %v980
        %v1021 = vunpack.c.h.b16 %v980
        %v1022 = vunpack.c.l.b16 %v981
        %v1023 = vunpack.c.h.b16 %v981
        %v1024 = vunpack.c.l.b16 %v982
        %v1025 = vunpack.c.h.b16 %v982
        %v1026 = vunpack.c.l.b16 %v983
        %v1027 = vunpack.c.h.b16 %v983
        %v1028 = vunpack.c.l.b16 %v984
        %v1029 = vunpack.c.h.b16 %v984
        %v1030 = vunpack.c.l.b16 %v985
        %v1031 = vunpack.c.h.b16 %v985
        %v1032 = vunpack.c.l.b16 %v986
        %v1033 = vunpack.c.h.b16 %v986
        %v1034 = vunpack.c.l.b16 %v987
        %v1035 = vunpack.c.h.b16 %v987
        %v1036 = vunpack.c.l.b16 %v988
        %v1037 = vunpack.c.h.b16 %v988
        %v1038 = vunpack.c.l.b16 %v989
        %v1039 = vunpack.c.h.b16 %v989
        %v1040 = vunpack.c.l.b16 %v990
        %v1041 = vunpack.c.h.b16 %v990
        %v1042 = vpack.c.b16 %v1008, %v1008
        %v1043 = vpack.c.b16 %v1009, %v1009
        %v1044 = vpack.c.b16 %v1010, %v1010
        %v1045 = vpack.c.b16 %v1011, %v1011
        %v1046 = vpack.c.b16 %v1012, %v1012
        %v1047 = vpack.c.b16 %v1013, %v1013
        %v1048 = vpack.c.b16 %v1014, %v1014
        %v1049 = vpack.c.b16 %v1015, %v1015
        %v1050 = vpack.c.b16 %v1016, %v1016
        %v1051 = vpack.c.b16 %v1017, %v1017
        %v1052 = vpack.c.b16 %v1018, %v1018
        %v1053 = vpack.c.b16 %v1019, %v1019
        %v1054 = vpack.c.b16 %v1020, %v1020
        %v1055 = vpack.c.b16 %v1021, %v1021
        %v1056 = vpack.c.b16 %v1022, %v1022
        %v1057 = vpack.c.b16 %v1023, %v1023
        %v1058 = vpack.c.b16 %v1024, %v1024
        %v1059 = vpack.c.b16 %v1025, %v1025
        %v1060 = vpack.c.b16 %v1026, %v1026
        %v1061 = vpack.c.b16 %v1027, %v1027
        %v1062 = vpack.c.b16 %v1028, %v1028
        %v1063 = vpack.c.b16 %v1029, %v1029
        %v1064 = vpack.c.b16 %v1030, %v1030
        %v1065 = vpack.c.b16 %v1031, %v1031
        %v1066 = vpack.c.b16 %v1032, %v1032
        %v1067 = vpack.c.b16 %v1033, %v1033
        %v1068 = vpack.c.b16 %v1034, %v1034
        %v1069 = vpack.c.b16 %v1035, %v1035
        %v1070 = vpack.c.b16 %v1036, %v1036
        %v1071 = vpack.c.b16 %v1037, %v1037
        %v1072 = vpack.c.b16 %v1038, %v1038
        %v1073 = vpack.c.b16 %v1039, %v1039
        %v1074 = vpack.c.b16 %v1040, %v1040
        %v1075 = vpack.c.b16 %v1041, %v1041
        %1110 = vst [vmem:[%s217] sm:$0xf] %v1042
        %1111 = vst [vmem:[%s217 + $0x4] sm:$0xf] %v1043
        %1112 = vst [vmem:[%s217 + $0x8] sm:$0xf] %v1044
        %1113 = vst [vmem:[%s217 + $0xc] sm:$0xf] %v1045
        %1114 = vst [vmem:[%s217 + $0x10] sm:$0xf] %v1046
        %1115 = vst [vmem:[%s217 + $0x14] sm:$0xf] %v1047
        %1116 = vst [vmem:[%s217 + $0x18] sm:$0xf] %v1048
        %1117 = vst [vmem:[%s217 + $0x1c] sm:$0xf] %v1049
        %1118 = vst [vmem:[%s217 + $0x20] sm:$0xf] %v1050
        %1119 = vst [vmem:[%s217 + $0x24] sm:$0xf] %v1051
        %1120 = vst [vmem:[%s217 + $0x28] sm:$0xf] %v1052
        %1121 = vst [vmem:[%s217 + $0x2c] sm:$0xf] %v1053
        %1122 = vst [vmem:[%s217 + $0x30] sm:$0xf] %v1054
        %1123 = vst [vmem:[%s217 + $0x34] sm:$0xf] %v1055
        %1124 = vst [vmem:[%s217 + $0x38] sm:$0xf] %v1056
        %1125 = vst [vmem:[%s217 + $0x3c] sm:$0xf] %v1057
        %1126 = vst [vmem:[%s217 + $0x40] sm:$0xf] %v1058
        %1127 = vst [vmem:[%s217 + $0x44] sm:$0xf] %v1059
        %1128 = vst [vmem:[%s217 + $0x48] sm:$0xf] %v1060
        %1129 = vst [vmem:[%s217 + $0x4c] sm:$0xf] %v1061
        %1130 = vst [vmem:[%s217 + $0x50] sm:$0xf] %v1062
        %1131 = vst [vmem:[%s217 + $0x54] sm:$0xf] %v1063
        %1132 = vst [vmem:[%s217 + $0x58] sm:$0xf] %v1064
        %1133 = vst [vmem:[%s217 + $0x5c] sm:$0xf] %v1065
        %1134 = vst [vmem:[%s217 + $0x60] sm:$0xf] %v1066
        %1135 = vst [vmem:[%s217 + $0x64] sm:$0xf] %v1067
        %1136 = vst [vmem:[%s217 + $0x68] sm:$0xf] %v1068
        %1137 = vst [vmem:[%s217 + $0x6c] sm:$0xf] %v1069
        %1138 = vst [vmem:[%s217 + $0x70] sm:$0xf] %v1070
        %1139 = vst [vmem:[%s217 + $0x74] sm:$0xf] %v1071
        %1140 = vst [vmem:[%s217 + $0x78] sm:$0xf] %v1072
        %1141 = vst [vmem:[%s217 + $0x7c] sm:$0xf] %v1073
        %1142 = vst [vmem:[%s217 + $0x80] sm:$0xf] %v1074
        %1143 = vst [vmem:[%s217 + $0x84] sm:$0xf] %v1075
        %s1144 = sand.u32 %s137, 1
        %s1145 = scalar_lea.sflag [#allocation3], %s1144
        %s1146 = sand.u32 %s137, 1
        %s1147 = smul.addr %s1146, 136
        %s1148 = scalar_lea.vmem [#allocation2], %s1147
        // Predicated region
        $region41: #{tpu_custom_call.1} parent=39 // pred_check
          %p1149 = pneg %p147
        $region42: #{tpu_custom_call.1} parent=39 // pred_check_branch
          %1151 = sbr.rel (%p1149) target = $region44
        $region43: #{tpu_custom_call.1} parent=39 // pred_region
          %s1153 = ssub.s32 2176, 2176
          %1154 = vsyncadd %s1145, %s1153
          %s1155 = smul.addr %s19, 34
          %s1156 = smul.addr %s1155, 64
          %s1157 = scalar_lea.hbm %s5, %s1156
          %s1158 = sshll.u32 %s1148, 4
          %s1159 = int_to_ptr.vmem [resolvable:$true] %s1158
          %1164 = dma.vmem_to_hbm [thread:$0]  %s1159, 2176, %s1157, %s1145, 64, 64, 4
        $region44: #{tpu_custom_call.1} parent=39 // pred_fallthru
          _
      $region40: #{tpu_custom_call.1} parent=5 // pred_fallthru
        _
      %p1165 = scmp.le.s32.totalorder 2, %s14
      // Predicated region
      $region45: #{tpu_custom_call.1} parent=5 // pred_check
        %p1166 = pneg %p1165
      $region46: #{tpu_custom_call.1} parent=5 // pred_check_branch
        %1168 = sbr.rel (%p1166) target = $region48
      $region47: #{tpu_custom_call.1} parent=5 // pred_region
        %s1169 = ssub.s32 %s14, 2
        // Predicated region
        $region49: #{tpu_custom_call.1} parent=47 // pred_check
          %p1170 = pneg %p153
        $region50: #{tpu_custom_call.1} parent=47 // pred_check_branch
          %1172 = sbr.rel (%p1170) target = $region52
        $region51: #{tpu_custom_call.1} parent=47 // pred_region
          %s1173 = sand.u32 %s138, 1
          %s1174 = scalar_lea.sflag [#allocation3], %s1173
          %s1175 = sand.u32 %s138, 1
          %s1176 = smul.addr %s1175, 136
          %s1177 = scalar_lea.vmem [#allocation2], %s1176
          %1178 = dma.done %s1174, 2176
        $region52: #{tpu_custom_call.1} parent=47 // pred_fallthru
          _
      $region48: #{tpu_custom_call.1} parent=5 // pred_fallthru
        _
    $region6: #{tpu_custom_call.1} parent=1 // loop_footer
      %s18 = sadd.s32 1, %s14
    $region7: #{tpu_custom_call.1} parent=1 // loop_footer_branch
      %13 = sbr.rel target = $region3
    $region8: #{tpu_custom_call.1} parent=1 // loop_exit
      _
    %1179 = vsyncpa [#allocation3], 1
    %s1180 = scalar_lea.sflag [#allocation3], 1
    %1181 = vsyncpa %s1180, 1

</llo_original>
